<compile_context>
chip_gen: v7x
topology: tpu7x:2x2x1
jax: 0.10.0
libtpu: 0.0.40
codegen_flags: <defaults>
</compile_context>

<pallas_src>
import functools

import jax
import jax.numpy as jnp
from jax.experimental import pallas as pl
from jax.experimental.pallas import tpu as pltpu

LANE = 128          # lane width / MXU-friendly feature pad target
NEG_SLOPE = 0.25    # leaky_relu negative slope

# Budget for the "adjacency resident in VMEM" fused plan.  Conservative for
# v7x (64 MiB VMEM per TensorCore); v5e/v6e (128 MiB) could go higher.
_RESIDENT_VMEM_BUDGET = 48 << 20
_VMEM_CAP = 64 << 20            # never request more scoped VMEM than v7x has
_ADJ_TILE = 256                 # streamed-plan adjacency tile (rows and K)


def _round_up(v, m):
    return ((v + m - 1) // m) * m


def _pad2d(a, rows, cols, dtype):
    r, c = a.shape
    if (r, c) != (rows, cols):
        a = jnp.pad(a, ((0, rows - r), (0, cols - c)))
    return a.astype(dtype)


def _pad_bias(b, cols):
    return jnp.pad(b, (0, cols - b.shape[0])).reshape(1, cols).astype(jnp.float32)


def _leaky_relu(v):
    return jnp.where(v > 0, v, NEG_SLOPE * v)


# ---------------------------------------------------------------------------
# Plan A: everything resident in VMEM, all three layers fused in one call.
# ---------------------------------------------------------------------------
def _gcn_e_fused_kernel(x_ref, adj_ref, w1_ref, w2_ref, w3_ref,
                        b1_ref, b2_ref, b3_ref, o_ref):
    compute_dtype = x_ref.dtype            # f32 or bf16 (MXU input dtype)
    adj = adj_ref[...]                     # (Np, Np): loaded once, reused 3x
    h = x_ref[...]                         # (Np, D0p)

    out = None
    # Three layers, statically unrolled at trace time.
    for w_ref, b_ref in ((w1_ref, b1_ref), (w2_ref, b2_ref), (w3_ref, b3_ref)):
        support = jnp.dot(h, w_ref[...], preferred_element_type=jnp.float32)
        out = jnp.dot(adj, support.astype(compute_dtype),
                      preferred_element_type=jnp.float32)
        out = _leaky_relu(out + b_ref[...])      # bias + leaky_relu in f32
        h = out.astype(compute_dtype)            # input to the next layer

    o_ref[...] = out.astype(o_ref.dtype)


def _gcn_e_fused(x_p, adj_p, w_p, b_p, vmem_bytes):
    n_p = adj_p.shape[0]
    d_out_p = w_p[2].shape[1]
    vmem = pl.BlockSpec(memory_space=pltpu.MemorySpace.VMEM)   # single-buffered
    return pl.pallas_call(
        _gcn_e_fused_kernel,
        out_shape=jax.ShapeDtypeStruct((n_p, d_out_p), jnp.float32),
        in_specs=[vmem] * 8,
        out_specs=vmem,
        compiler_params=pltpu.CompilerParams(vmem_limit_bytes=vmem_bytes),
    )(x_p, adj_p, *w_p, *b_p)


# ---------------------------------------------------------------------------
# Plan B: streamed adjacency, one tiled pallas_call per layer.
# grid = (row tiles [parallel], adj-K tiles [arbitrary]); f32 accumulator.
# ---------------------------------------------------------------------------
def _gcn_layer_streamed_kernel(adj_ref, h_ref, w_ref, b_ref, o_ref, acc_ref):
    k = pl.program_id(1)

    @pl.when(k == 0)
    def _():
        acc_ref[...] = jnp.zeros_like(acc_ref)

    # support[k] = H[k_tile] @ W.  Recomputed per row tile: at most Din/tile
    # extra MXU work, hidden under the adjacency-tile DMA (the streamed matmul
    # is HBM-bound on adj at production N).
    support = jnp.dot(h_ref[...], w_ref[...], preferred_element_type=jnp.float32)
    acc_ref[...] += jnp.dot(adj_ref[...], support.astype(adj_ref.dtype),
                            preferred_element_type=jnp.float32)

    @pl.when(k == pl.num_programs(1) - 1)
    def _():
        # Bias + leaky_relu + output-dtype recast folded into the finalize so
        # the epilogue is one pass per output tile, hidden under the next
        # tile's DMA/MXU work.
        o_ref[...] = _leaky_relu(acc_ref[...] + b_ref[...]).astype(o_ref.dtype)


def _gcn_layer_streamed(adj_p, h_p, w_p, b_p, out_dtype, tile, vmem_bytes):
    n_p = adj_p.shape[0]
    d_in_p = h_p.shape[1]
    d_out_p = w_p.shape[1]
    grid = (n_p // tile, n_p // tile)
    return pl.pallas_call(
        _gcn_layer_streamed_kernel,
        out_shape=jax.ShapeDtypeStruct((n_p, d_out_p), out_dtype),
        grid_spec=pltpu.PrefetchScalarGridSpec(
            num_scalar_prefetch=0,
            grid=grid,
            in_specs=[
                pl.BlockSpec((tile, tile), lambda r, k: (r, k)),       # adj tile
                pl.BlockSpec((tile, d_in_p), lambda r, k: (k, 0)),     # H K-tile
                pl.BlockSpec((d_in_p, d_out_p), lambda r, k: (0, 0)),  # W
                pl.BlockSpec((1, d_out_p), lambda r, k: (0, 0)),       # bias
            ],
            out_specs=pl.BlockSpec((tile, d_out_p), lambda r, k: (r, 0)),
            scratch_shapes=[pltpu.VMEM((tile, d_out_p), jnp.float32)],
        ),
        compiler_params=pltpu.CompilerParams(
            dimension_semantics=("parallel", "arbitrary"),
            vmem_limit_bytes=vmem_bytes,
        ),
    )(adj_p, h_p, w_p, b_p)


# ---------------------------------------------------------------------------
# Forward wrapper: plan selection, padding, dtype handling.
# ---------------------------------------------------------------------------
@functools.partial(jax.jit, static_argnames=("use_bf16", "force_streamed"))
def gcn_e_forward(params, x, adj, *, use_bf16=True, force_streamed=False):
    """GCN_E.forward (eval mode): gc1 -> lrelu -> gc2 -> lrelu -> gc3 -> lrelu."""
    (w1, b1), (w2, b2), (w3, b3) = params
    n, f_in = x.shape
    dims = [f_in, w1.shape[1], w2.shape[1], w3.shape[1]]

    compute_dtype = jnp.bfloat16 if use_bf16 else jnp.float32
    itemsize = 2 if use_bf16 else 4
    sublane = 16 if use_bf16 else 8

    # Feature dims stay lane-dense (multiples of 128).
    d_p = [_round_up(max(d, LANE), LANE) for d in dims]
    weights = (w1, w2, w3)
    biases = (b1, b2, b3)

    # Footprint of the adjacency-resident fused plan (single-buffered).
    n_res = _round_up(max(n, sublane), sublane)     # minimal node padding
    resident_bytes = (
        n_res * n_res * itemsize                                 # adj
        + n_res * d_p[0] * itemsize                              # x
        + sum(d_p[i] * d_p[i + 1] * itemsize for i in range(3))  # weights
        + sum(4 * d for d in d_p[1:])                            # biases (f32)
        + n_res * d_p[3] * 4                                     # f32 output
        + 3 * n_res * max(d_p) * 4                               # live activations
    )
    use_resident = (not force_streamed) and resident_bytes <= _RESIDENT_VMEM_BUDGET

    if use_resident:
        n_p = n_res
        x_p = _pad2d(x, n_p, d_p[0], compute_dtype)
        adj_p = _pad2d(adj, n_p, n_p, compute_dtype)   # no-op pad when aligned
        w_p = [_pad2d(w, d_p[i], d_p[i + 1], compute_dtype)
               for i, w in enumerate(weights)]
        b_p = [_pad_bias(b, d_p[i + 1]) for i, b in enumerate(biases)]
        vmem_bytes = min(_VMEM_CAP, max(16 << 20, int(resident_bytes) + (8 << 20)))
        out_p = _gcn_e_fused(x_p, adj_p, w_p, b_p, vmem_bytes)
    else:
        tile = _ADJ_TILE
        n_p = _round_up(max(n, tile), tile)
        adj_p = _pad2d(adj, n_p, n_p, compute_dtype)
        h = _pad2d(x, n_p, d_p[0], compute_dtype)
        for i in range(3):
            w_pi = _pad2d(weights[i], d_p[i], d_p[i + 1], compute_dtype)
            b_pi = _pad_bias(biases[i], d_p[i + 1])
            last = i == 2
            out_dtype = jnp.float32 if last else compute_dtype
            out_itemsize = 4 if last else itemsize
            vmem_bytes = min(_VMEM_CAP, max(16 << 20, int(
                2 * tile * tile * itemsize               # adj tiles (2 buffers)
                + 2 * tile * d_p[i] * itemsize           # H K-tiles
                + 2 * d_p[i] * d_p[i + 1] * itemsize     # W
                + 2 * 8 * d_p[i + 1] * 4                 # bias
                + 2 * tile * d_p[i + 1] * out_itemsize   # output tiles
                + tile * d_p[i + 1] * 4                  # f32 accumulator
                + (8 << 20))))                           # compiler headroom
            h = _gcn_layer_streamed(adj_p, h, w_pi, b_pi, out_dtype, tile,
                                    vmem_bytes)
        out_p = h

    # Padded rows/cols are exact-zero contributions to the real block; drop them.
    return out_p[:n, :dims[3]]


def init_gcn_e_params(key, in_dim, hgcn_dim):
    """Deterministic xavier-normal weights, zero biases (matches __init__)."""
    dims = [in_dim] + list(hgcn_dim)
    params = []
    for i in range(3):
        key, sub = jax.random.split(key)
        fan_in, fan_out = dims[i], dims[i + 1]
        std = (2.0 / (fan_in + fan_out)) ** 0.5
        w = std * jax.random.normal(sub, (fan_in, fan_out), dtype=jnp.float32)
        b = jnp.zeros((fan_out,), dtype=jnp.float32)
        params.append((w, b))
    return params


def _reference_forward(params, x, adj):
    """Plain-JAX f32 reference for correctness checking."""
    h = x
    for (w, b) in params:
        h = _leaky_relu(adj @ (h @ w) + b)
    return h


if __name__ == "__main__":
    key = jax.random.PRNGKey(0)
    k_x, k_adj, k_p, k_x2, k_adj2 = jax.random.split(key, 5)

    in_dim = 16
    hgcn_dim = [32, 64, 32]
    params = init_gcn_e_params(k_p, in_dim, hgcn_dim)

    # ---- small graph: adjacency-resident fused plan ----
    n_small = 8
    x_s = jax.random.normal(k_x, (n_small, in_dim), dtype=jnp.float32)
    a = (jax.random.uniform(k_adj, (n_small, n_small)) > 0.5).astype(jnp.float32)
    a = jnp.maximum(a, a.T) + jnp.eye(n_small, dtype=jnp.float32)
    adj_s = a / jnp.sum(a, axis=1, keepdims=True)
    ref_s = _reference_forward(params, x_s, adj_s)

    out = jax.block_until_ready(gcn_e_forward(params, x_s, adj_s, use_bf16=False))
    assert out.shape == (n_small, hgcn_dim[2])
    assert jnp.allclose(out, ref_s, atol=1e-4, rtol=1e-4)

    out = jax.block_until_ready(gcn_e_forward(params, x_s, adj_s))  # bf16 default
    assert out.shape == (n_small, hgcn_dim[2])
    assert jnp.allclose(out, ref_s, atol=1e-1, rtol=1e-1)

    # ---- larger graph: streamed/tiled plan (row-parallel x K-arbitrary) ----
    n_big = 300
    x_b = jax.random.normal(k_x2, (n_big, in_dim), dtype=jnp.float32)
    a = (jax.random.uniform(k_adj2, (n_big, n_big)) > 0.97).astype(jnp.float32)
    a = jnp.maximum(a, a.T) + jnp.eye(n_big, dtype=jnp.float32)
    adj_b = a / jnp.sum(a, axis=1, keepdims=True)
    ref_b = _reference_forward(params, x_b, adj_b)

    out = jax.block_until_ready(
        gcn_e_forward(params, x_b, adj_b, use_bf16=False, force_streamed=True))
    assert out.shape == (n_big, hgcn_dim[2])
    assert jnp.allclose(out, ref_b, atol=1e-4, rtol=1e-2)

    out = jax.block_until_ready(
        gcn_e_forward(params, x_b, adj_b, force_streamed=True))    # bf16 default
    assert out.shape == (n_big, hgcn_dim[2])
    assert jnp.allclose(out, ref_b, atol=1e-1, rtol=1e-1)

    print("KERNEL_OK")
</pallas_src>

<mosaic_0001>
module attributes {stable_mosaic.version = 11 : i64} {
  func.func @_gcn_e_fused_kernel(%arg0: memref<8x128xf32, #tpu.memory_space<vmem>>, %arg1: memref<8x8xf32, #tpu.memory_space<vmem>>, %arg2: memref<128x128xf32, #tpu.memory_space<vmem>>, %arg3: memref<128x128xf32, #tpu.memory_space<vmem>>, %arg4: memref<128x128xf32, #tpu.memory_space<vmem>>, %arg5: memref<1x128xf32, #tpu.memory_space<vmem>>, %arg6: memref<1x128xf32, #tpu.memory_space<vmem>>, %arg7: memref<1x128xf32, #tpu.memory_space<vmem>>, %arg8: memref<8x128xf32, #tpu.memory_space<vmem>>) attributes {dimension_semantics = [], scalar_prefetch = 0 : i64, scratch_operands = 0 : i64, tpu.core_type = #tpu.core_type<tc>} {
    %c0 = arith.constant 0 : index
    %c0_0 = arith.constant 0 : index
    %0 = vector.load %arg1[%c0, %c0_0] : memref<8x8xf32, #tpu.memory_space<vmem>>, vector<8x8xf32>
    %c0_1 = arith.constant 0 : index
    %c0_2 = arith.constant 0 : index
    %1 = vector.load %arg0[%c0_1, %c0_2] : memref<8x128xf32, #tpu.memory_space<vmem>>, vector<8x128xf32>
    %c0_3 = arith.constant 0 : index
    %c0_4 = arith.constant 0 : index
    %2 = vector.load %arg2[%c0_3, %c0_4] : memref<128x128xf32, #tpu.memory_space<vmem>>, vector<128x128xf32>
    %cst = arith.constant dense<0.000000e+00> : vector<8x128xf32>
    %3 = tpu.matmul %1, %2, %cst {dimension_numbers = #tpu.dot_dimension_numbers<[1], [0], [0], [1], [0, 0, 1, 1], [], []>} : vector<8x128xf32>, vector<128x128xf32>, vector<8x128xf32> -> vector<8x128xf32>
    %cst_5 = arith.constant dense<0.000000e+00> : vector<8x128xf32>
    %4 = tpu.matmul %0, %3, %cst_5 {dimension_numbers = #tpu.dot_dimension_numbers<[1], [0], [0], [1], [0, 0, 1, 1], [], []>} : vector<8x8xf32>, vector<8x128xf32>, vector<8x128xf32> -> vector<8x128xf32>
    %c0_6 = arith.constant 0 : index
    %c0_7 = arith.constant 0 : index
    %5 = vector.load %arg5[%c0_6, %c0_7] : memref<1x128xf32, #tpu.memory_space<vmem>>, vector<1x128xf32>
    %6 = vector.broadcast %5 : vector<1x128xf32> to vector<8x128xf32>
    %7 = arith.addf %4, %6 : vector<8x128xf32>
    %cst_8 = arith.constant 0.000000e+00 : f32
    %8 = vector.broadcast %cst_8 : f32 to vector<8x128xf32>
    %9 = arith.cmpf ogt, %7, %8 : vector<8x128xf32>
    %cst_9 = arith.constant 2.500000e-01 : f32
    %10 = vector.broadcast %cst_9 : f32 to vector<8x128xf32>
    %11 = arith.mulf %10, %7 : vector<8x128xf32>
    %12 = arith.select %9, %7, %11 : vector<8x128xi1>, vector<8x128xf32>
    %c0_10 = arith.constant 0 : index
    %c0_11 = arith.constant 0 : index
    %13 = vector.load %arg3[%c0_10, %c0_11] : memref<128x128xf32, #tpu.memory_space<vmem>>, vector<128x128xf32>
    %cst_12 = arith.constant dense<0.000000e+00> : vector<8x128xf32>
    %14 = tpu.matmul %12, %13, %cst_12 {dimension_numbers = #tpu.dot_dimension_numbers<[1], [0], [0], [1], [0, 0, 1, 1], [], []>} : vector<8x128xf32>, vector<128x128xf32>, vector<8x128xf32> -> vector<8x128xf32>
    %cst_13 = arith.constant dense<0.000000e+00> : vector<8x128xf32>
    %15 = tpu.matmul %0, %14, %cst_13 {dimension_numbers = #tpu.dot_dimension_numbers<[1], [0], [0], [1], [0, 0, 1, 1], [], []>} : vector<8x8xf32>, vector<8x128xf32>, vector<8x128xf32> -> vector<8x128xf32>
    %c0_14 = arith.constant 0 : index
    %c0_15 = arith.constant 0 : index
    %16 = vector.load %arg6[%c0_14, %c0_15] : memref<1x128xf32, #tpu.memory_space<vmem>>, vector<1x128xf32>
    %17 = vector.broadcast %16 : vector<1x128xf32> to vector<8x128xf32>
    %18 = arith.addf %15, %17 : vector<8x128xf32>
    %cst_16 = arith.constant 0.000000e+00 : f32
    %19 = vector.broadcast %cst_16 : f32 to vector<8x128xf32>
    %20 = arith.cmpf ogt, %18, %19 : vector<8x128xf32>
    %cst_17 = arith.constant 2.500000e-01 : f32
    %21 = vector.broadcast %cst_17 : f32 to vector<8x128xf32>
    %22 = arith.mulf %21, %18 : vector<8x128xf32>
    %23 = arith.select %20, %18, %22 : vector<8x128xi1>, vector<8x128xf32>
    %c0_18 = arith.constant 0 : index
    %c0_19 = arith.constant 0 : index
    %24 = vector.load %arg4[%c0_18, %c0_19] : memref<128x128xf32, #tpu.memory_space<vmem>>, vector<128x128xf32>
    %cst_20 = arith.constant dense<0.000000e+00> : vector<8x128xf32>
    %25 = tpu.matmul %23, %24, %cst_20 {dimension_numbers = #tpu.dot_dimension_numbers<[1], [0], [0], [1], [0, 0, 1, 1], [], []>} : vector<8x128xf32>, vector<128x128xf32>, vector<8x128xf32> -> vector<8x128xf32>
    %cst_21 = arith.constant dense<0.000000e+00> : vector<8x128xf32>
    %26 = tpu.matmul %0, %25, %cst_21 {dimension_numbers = #tpu.dot_dimension_numbers<[1], [0], [0], [1], [0, 0, 1, 1], [], []>} : vector<8x8xf32>, vector<8x128xf32>, vector<8x128xf32> -> vector<8x128xf32>
    %c0_22 = arith.constant 0 : index
    %c0_23 = arith.constant 0 : index
    %27 = vector.load %arg7[%c0_22, %c0_23] : memref<1x128xf32, #tpu.memory_space<vmem>>, vector<1x128xf32>
    %28 = vector.broadcast %27 : vector<1x128xf32> to vector<8x128xf32>
    %29 = arith.addf %26, %28 : vector<8x128xf32>
    %cst_24 = arith.constant 0.000000e+00 : f32
    %30 = vector.broadcast %cst_24 : f32 to vector<8x128xf32>
    %31 = arith.cmpf ogt, %29, %30 : vector<8x128xf32>
    %cst_25 = arith.constant 2.500000e-01 : f32
    %32 = vector.broadcast %cst_25 : f32 to vector<8x128xf32>
    %33 = arith.mulf %32, %29 : vector<8x128xf32>
    %34 = arith.select %31, %29, %33 : vector<8x128xi1>, vector<8x128xf32>
    %c0_26 = arith.constant 0 : index
    %c0_27 = arith.constant 0 : index
    %35 = vector.load %arg8[%c0_26, %c0_27] : memref<8x128xf32, #tpu.memory_space<vmem>>, vector<8x128xf32>
    tpu.vector_store %arg8[%c0_26, %c0_27], %34 {strides = array<i32>} : memref<8x128xf32, #tpu.memory_space<vmem>>, vector<8x128xf32>,
    return
  }
}

</mosaic_0001>

<llo_original>
// kernel: gcn_e_forward.1
$region0: #{gcn_e_forward.1}
  #allocation0 [shape = 'u32[]', space=smem, size = 0x4, offset = 0x4, fixed_abs, tag = 'smem constant byte address 0x4 - core index']
  #allocation1 [shape = 'u32[144,128]{1,0:T(1,128)}', space=vmem, size = 0x12000, scoped, tag = 'internal scratch']
  %s0 = inlined_call_operand.vmem [shape: f32[8,128], index: 0, kind: input, shape index: {}]
  %s1 = inlined_call_operand.vmem [shape: f32[8,8], index: 1, kind: input, shape index: {}]
  %s2 = inlined_call_operand.vmem [shape: f32[128,128], index: 2, kind: input, shape index: {}]
  %s3 = inlined_call_operand.vmem [shape: f32[128,128], index: 3, kind: input, shape index: {}]
  %s4 = inlined_call_operand.vmem [shape: f32[128,128], index: 4, kind: input, shape index: {}]
  %s5 = inlined_call_operand.vmem [shape: f32[1,128], index: 5, kind: input, shape index: {}]
  %s6 = inlined_call_operand.vmem [shape: f32[1,128], index: 6, kind: input, shape index: {}]
  %s7 = inlined_call_operand.vmem [shape: f32[1,128], index: 7, kind: input, shape index: {}]
  %s8 = inlined_call_operand.hbm [shape: f32[8,128], index: 8, kind: output, shape index: {}]
  %s9 = sld [smem:[#allocation0]]
  $region42: #{gcn_e_forward.1} parent=0
    _
  %s11 = ssub.s32 1, %s9
  %s12 = scalar_select 0, %s11, %s9
  $region1: #{gcn_e_forward.1} parent=0
    #allocation2 [shape = 'u8[4096]{0}', space=vmem, size = 0x1000, scoped, tag = 'output window, operand 0, single buffered']
    #allocation3 [shape = 's32[1]{0}', space=sflag, size = 0x4, scoped, tag = 'scoped memory for gcn_e_forward.1']
    %13 = vsyncpa [#allocation3], 0
    // Predicated region
    $region2: #{gcn_e_forward.1} parent=1 // pred_check
      _
    $region3: #{gcn_e_forward.1} parent=1 // pred_check_branch
      %15 = sbr.rel (0) target = $region5
    $region4: #{gcn_e_forward.1} parent=1 // pred_region
      _
    $region5: #{gcn_e_forward.1} parent=1 // pred_fallthru
      _
    // Predicated region
    $region6: #{gcn_e_forward.1} parent=1 // pred_check
      _
    $region7: #{gcn_e_forward.1} parent=1 // pred_check_branch
      %17 = sbr.rel (0) target = $region9
    $region8: #{gcn_e_forward.1} parent=1 // pred_region
      _
    $region9: #{gcn_e_forward.1} parent=1 // pred_fallthru
      _
    // Predicated region
    $region10: #{gcn_e_forward.1} parent=1 // pred_check
      _
    $region11: #{gcn_e_forward.1} parent=1 // pred_check_branch
      %19 = sbr.rel (0) target = $region13
    $region12: #{gcn_e_forward.1} parent=1 // pred_region
      _
    $region13: #{gcn_e_forward.1} parent=1 // pred_fallthru
      _
    // Predicated region
    $region14: #{gcn_e_forward.1} parent=1 // pred_check
      _
    $region15: #{gcn_e_forward.1} parent=1 // pred_check_branch
      %21 = sbr.rel (0) target = $region17
    $region16: #{gcn_e_forward.1} parent=1 // pred_region
      _
    $region17: #{gcn_e_forward.1} parent=1 // pred_fallthru
      _
    // Predicated region
    $region18: #{gcn_e_forward.1} parent=1 // pred_check
      _
    $region19: #{gcn_e_forward.1} parent=1 // pred_check_branch
      %23 = sbr.rel (0) target = $region21
    $region20: #{gcn_e_forward.1} parent=1 // pred_region
      _
    $region21: #{gcn_e_forward.1} parent=1 // pred_fallthru
      _
    // Predicated region
    $region22: #{gcn_e_forward.1} parent=1 // pred_check
      _
    $region23: #{gcn_e_forward.1} parent=1 // pred_check_branch
      %25 = sbr.rel (0) target = $region25
    $region24: #{gcn_e_forward.1} parent=1 // pred_region
      _
    $region25: #{gcn_e_forward.1} parent=1 // pred_fallthru
      _
    // Predicated region
    $region26: #{gcn_e_forward.1} parent=1 // pred_check
      _
    $region27: #{gcn_e_forward.1} parent=1 // pred_check_branch
      %27 = sbr.rel (0) target = $region29
    $region28: #{gcn_e_forward.1} parent=1 // pred_region
      _
    $region29: #{gcn_e_forward.1} parent=1 // pred_fallthru
      _
    // Predicated region
    $region30: #{gcn_e_forward.1} parent=1 // pred_check
      _
    $region31: #{gcn_e_forward.1} parent=1 // pred_check_branch
      %29 = sbr.rel (0) target = $region33
    $region32: #{gcn_e_forward.1} parent=1 // pred_region
      _
    $region33: #{gcn_e_forward.1} parent=1 // pred_fallthru
      _
    %v30 = vld [vmem:[%s1] sm:$0xff]
    %v31 = vld [vmem:[%s0] sm:$0xff]
    %v32 = vld [vmem:[%s2] sm:$0xff]
    %v33 = vld [vmem:[%s2 + $0x8] sm:$0xff]
    %v34 = vld [vmem:[%s2 + $0x10] sm:$0xff]
    %v35 = vld [vmem:[%s2 + $0x18] sm:$0xff]
    %v36 = vld [vmem:[%s2 + $0x20] sm:$0xff]
    %v37 = vld [vmem:[%s2 + $0x28] sm:$0xff]
    %v38 = vld [vmem:[%s2 + $0x30] sm:$0xff]
    %v39 = vld [vmem:[%s2 + $0x38] sm:$0xff]
    %v40 = vld [vmem:[%s2 + $0x40] sm:$0xff]
    %v41 = vld [vmem:[%s2 + $0x48] sm:$0xff]
    %v42 = vld [vmem:[%s2 + $0x50] sm:$0xff]
    %v43 = vld [vmem:[%s2 + $0x58] sm:$0xff]
    %v44 = vld [vmem:[%s2 + $0x60] sm:$0xff]
    %v45 = vld [vmem:[%s2 + $0x68] sm:$0xff]
    %v46 = vld [vmem:[%s2 + $0x70] sm:$0xff]
    %v47 = vld [vmem:[%s2 + $0x78] sm:$0xff]
    %48 = vmatprep.subr.mxu0 0.0
    %49 = vmatpush1.msra.mxu0 %v32
    %50 = vmatprep.subr.mxu0 0.0
    %51 = vmatpush1.msra.mxu0 %v33
    %52 = vmatprep.subr.mxu0 0.0
    %53 = vmatpush1.msra.mxu0 %v34
    %54 = vmatprep.subr.mxu0 0.0
    %55 = vmatpush1.msra.mxu0 %v35
    %56 = vmatprep.subr.mxu0 0.0
    %57 = vmatpush1.msra.mxu0 %v36
    %58 = vmatprep.subr.mxu0 0.0
    %59 = vmatpush1.msra.mxu0 %v37
    %60 = vmatprep.subr.mxu0 0.0
    %61 = vmatpush1.msra.mxu0 %v38
    %62 = vmatprep.subr.mxu0 0.0
    %63 = vmatpush1.msra.mxu0 %v39
    %64 = vmatprep.subr.mxu0 0.0
    %65 = vmatpush1.msra.mxu0 %v40
    %66 = vmatprep.subr.mxu0 0.0
    %67 = vmatpush1.msra.mxu0 %v41
    %68 = vmatprep.subr.mxu0 0.0
    %69 = vmatpush1.msra.mxu0 %v42
    %70 = vmatprep.subr.mxu0 0.0
    %71 = vmatpush1.msra.mxu0 %v43
    %72 = vmatprep.subr.mxu0 0.0
    %73 = vmatpush1.msra.mxu0 %v44
    %74 = vmatprep.subr.mxu0 0.0
    %75 = vmatpush1.msra.mxu0 %v45
    %76 = vmatprep.subr.mxu0 0.0
    %77 = vmatpush1.msra.mxu0 %v46
    %78 = vmatprep.subr.mxu0 0.0
    %79 = vmatpush1.msra.mxu0 %v47
    %80 = vmatprep.subr.mxu0 0.0
    %81 = vmatpush1.msra.mxu0 0.0
    %82 = vmatprep.subr.mxu0 0.0
    %83 = vmatpush1.msra.mxu0 0.0
    %84 = vmatprep.subr.mxu0 0.0
    %85 = vmatpush1.msra.mxu0 0.0
    %86 = vmatprep.subr.mxu0 0.0
    %87 = vmatpush1.msra.mxu0 0.0
    %88 = vmatprep.subr.mxu0 0.0
    %89 = vmatpush1.msra.mxu0 0.0
    %90 = vmatprep.subr.mxu0 0.0
    %91 = vmatpush1.msra.mxu0 0.0
    %92 = vmatprep.subr.mxu0 0.0
    %93 = vmatpush1.msra.mxu0 0.0
    %94 = vmatprep.subr.mxu0 0.0
    %95 = vmatpush1.msra.mxu0 0.0
    %96 = vmatprep.subr.mxu0 0.0
    %97 = vmatpush1.msra.mxu0 0.0
    %98 = vmatprep.subr.mxu0 0.0
    %99 = vmatpush1.msra.mxu0 0.0
    %100 = vmatprep.subr.mxu0 0.0
    %101 = vmatpush1.msra.mxu0 0.0
    %102 = vmatprep.subr.mxu0 0.0
    %103 = vmatpush1.msra.mxu0 0.0
    %104 = vmatprep.subr.mxu0 0.0
    %105 = vmatpush1.msra.mxu0 0.0
    %106 = vmatprep.subr.mxu0 0.0
    %107 = vmatpush1.msra.mxu0 0.0
    %108 = vmatprep.subr.mxu0 0.0
    %109 = vmatpush1.msra.mxu0 0.0
    %110 = vmatprep.subr.mxu0 0.0
    %111 = vmatpush1.msra.mxu0 0.0
    %112 = vmatprep.mubr.f32.mxu0 0.0
    %113 = vmatmul.mubr.f32.gmra.mrb[0].mxu0 %v31
    %v114 = vpop.f32.mrb[0].mxu0
    %v115 = vadd.f32 0.0, %v114
    %v116 = vpop.f32.mrb[0].mxu0
    %117 = vdwg.mxu0
    %v118 = vld [vmem:[%s5] sm:$0x1]
    %v120 = vlaneseq
    %v121 = vshrl.u32 %v120, 7
    %v122 = vsub.s32 0, %v121
    %v123 = vrot.slane %v118, %v122
    %vm125 = vcmask 64512
    %v127 = vsel %vm125, %v30, 0
    %129 = vmatprep.subr.mxu0 0.0
    %130 = vmatpush1.msra.mxu0 %v115
    %131 = vmatprep.subr.mxu0 0.0
    %132 = vmatpush1.msra.mxu0 0.0
    %133 = vmatprep.subr.mxu0 0.0
    %134 = vmatpush1.msra.mxu0 0.0
    %135 = vmatprep.subr.mxu0 0.0
    %136 = vmatpush1.msra.mxu0 0.0
    %137 = vmatprep.subr.mxu0 0.0
    %138 = vmatpush1.msra.mxu0 0.0
    %139 = vmatprep.subr.mxu0 0.0
    %140 = vmatpush1.msra.mxu0 0.0
    %141 = vmatprep.subr.mxu0 0.0
    %142 = vmatpush1.msra.mxu0 0.0
    %143 = vmatprep.subr.mxu0 0.0
    %144 = vmatpush1.msra.mxu0 0.0
    %145 = vmatprep.subr.mxu0 0.0
    %146 = vmatpush1.msra.mxu0 0.0
    %147 = vmatprep.subr.mxu0 0.0
    %148 = vmatpush1.msra.mxu0 0.0
    %149 = vmatprep.subr.mxu0 0.0
    %150 = vmatpush1.msra.mxu0 0.0
    %151 = vmatprep.subr.mxu0 0.0
    %152 = vmatpush1.msra.mxu0 0.0
    %153 = vmatprep.subr.mxu0 0.0
    %154 = vmatpush1.msra.mxu0 0.0
    %155 = vmatprep.subr.mxu0 0.0
    %156 = vmatpush1.msra.mxu0 0.0
    %157 = vmatprep.subr.mxu0 0.0
    %158 = vmatpush1.msra.mxu0 0.0
    %159 = vmatprep.subr.mxu0 0.0
    %160 = vmatpush1.msra.mxu0 0.0
    %161 = vmatprep.subr.mxu0 0.0
    %162 = vmatpush1.msra.mxu0 0.0
    %163 = vmatprep.subr.mxu0 0.0
    %164 = vmatpush1.msra.mxu0 0.0
    %165 = vmatprep.subr.mxu0 0.0
    %166 = vmatpush1.msra.mxu0 0.0
    %167 = vmatprep.subr.mxu0 0.0
    %168 = vmatpush1.msra.mxu0 0.0
    %169 = vmatprep.subr.mxu0 0.0
    %170 = vmatpush1.msra.mxu0 0.0
    %171 = vmatprep.subr.mxu0 0.0
    %172 = vmatpush1.msra.mxu0 0.0
    %173 = vmatprep.subr.mxu0 0.0
    %174 = vmatpush1.msra.mxu0 0.0
    %175 = vmatprep.subr.mxu0 0.0
    %176 = vmatpush1.msra.mxu0 0.0
    %177 = vmatprep.subr.mxu0 0.0
    %178 = vmatpush1.msra.mxu0 0.0
    %179 = vmatprep.subr.mxu0 0.0
    %180 = vmatpush1.msra.mxu0 0.0
    %181 = vmatprep.subr.mxu0 0.0
    %182 = vmatpush1.msra.mxu0 0.0
    %183 = vmatprep.subr.mxu0 0.0
    %184 = vmatpush1.msra.mxu0 0.0
    %185 = vmatprep.subr.mxu0 0.0
    %186 = vmatpush1.msra.mxu0 0.0
    %187 = vmatprep.subr.mxu0 0.0
    %188 = vmatpush1.msra.mxu0 0.0
    %189 = vmatprep.subr.mxu0 0.0
    %190 = vmatpush1.msra.mxu0 0.0
    %191 = vmatprep.subr.mxu0 0.0
    %192 = vmatpush1.msra.mxu0 0.0
    %193 = vmatprep.mubr.f32.mxu0 0.0
    %194 = vmatmul.mubr.f32.gmra.mrb[0].mxu0 %v127
    %v195 = vpop.f32.mrb[0].mxu0
    %v196 = vadd.f32 %v123, %v195
    %v197 = vpop.f32.mrb[0].mxu0
    %198 = vdwg.mxu0
    %vm199 = vcmp.gt.f32.partialorder %v196, 0.0
    %v200 = vmul.f32 %v196, 0.25
    %v201 = vsel %vm199, %v196, %v200
    %v202 = vld [vmem:[%s3] sm:$0xff]
    %v203 = vld [vmem:[%s3 + $0x8] sm:$0xff]
    %v204 = vld [vmem:[%s3 + $0x10] sm:$0xff]
    %v205 = vld [vmem:[%s3 + $0x18] sm:$0xff]
    %v206 = vld [vmem:[%s3 + $0x20] sm:$0xff]
    %v207 = vld [vmem:[%s3 + $0x28] sm:$0xff]
    %v208 = vld [vmem:[%s3 + $0x30] sm:$0xff]
    %v209 = vld [vmem:[%s3 + $0x38] sm:$0xff]
    %v210 = vld [vmem:[%s3 + $0x40] sm:$0xff]
    %v211 = vld [vmem:[%s3 + $0x48] sm:$0xff]
    %v212 = vld [vmem:[%s3 + $0x50] sm:$0xff]
    %v213 = vld [vmem:[%s3 + $0x58] sm:$0xff]
    %v214 = vld [vmem:[%s3 + $0x60] sm:$0xff]
    %v215 = vld [vmem:[%s3 + $0x68] sm:$0xff]
    %v216 = vld [vmem:[%s3 + $0x70] sm:$0xff]
    %v217 = vld [vmem:[%s3 + $0x78] sm:$0xff]
    %218 = vmatprep.subr.mxu0 0.0
    %219 = vmatpush1.msra.mxu0 %v202
    %220 = vmatprep.subr.mxu0 0.0
    %221 = vmatpush1.msra.mxu0 %v203
    %222 = vmatprep.subr.mxu0 0.0
    %223 = vmatpush1.msra.mxu0 %v204
    %224 = vmatprep.subr.mxu0 0.0
    %225 = vmatpush1.msra.mxu0 %v205
    %226 = vmatprep.subr.mxu0 0.0
    %227 = vmatpush1.msra.mxu0 %v206
    %228 = vmatprep.subr.mxu0 0.0
    %229 = vmatpush1.msra.mxu0 %v207
    %230 = vmatprep.subr.mxu0 0.0
    %231 = vmatpush1.msra.mxu0 %v208
    %232 = vmatprep.subr.mxu0 0.0
    %233 = vmatpush1.msra.mxu0 %v209
    %234 = vmatprep.subr.mxu0 0.0
    %235 = vmatpush1.msra.mxu0 %v210
    %236 = vmatprep.subr.mxu0 0.0
    %237 = vmatpush1.msra.mxu0 %v211
    %238 = vmatprep.subr.mxu0 0.0
    %239 = vmatpush1.msra.mxu0 %v212
    %240 = vmatprep.subr.mxu0 0.0
    %241 = vmatpush1.msra.mxu0 %v213
    %242 = vmatprep.subr.mxu0 0.0
    %243 = vmatpush1.msra.mxu0 %v214
    %244 = vmatprep.subr.mxu0 0.0
    %245 = vmatpush1.msra.mxu0 %v215
    %246 = vmatprep.subr.mxu0 0.0
    %247 = vmatpush1.msra.mxu0 %v216
    %248 = vmatprep.subr.mxu0 0.0
    %249 = vmatpush1.msra.mxu0 %v217
    %250 = vmatprep.subr.mxu0 0.0
    %251 = vmatpush1.msra.mxu0 0.0
    %252 = vmatprep.subr.mxu0 0.0
    %253 = vmatpush1.msra.mxu0 0.0
    %254 = vmatprep.subr.mxu0 0.0
    %255 = vmatpush1.msra.mxu0 0.0
    %256 = vmatprep.subr.mxu0 0.0
    %257 = vmatpush1.msra.mxu0 0.0
    %258 = vmatprep.subr.mxu0 0.0
    %259 = vmatpush1.msra.mxu0 0.0
    %260 = vmatprep.subr.mxu0 0.0
    %261 = vmatpush1.msra.mxu0 0.0
    %262 = vmatprep.subr.mxu0 0.0
    %263 = vmatpush1.msra.mxu0 0.0
    %264 = vmatprep.subr.mxu0 0.0
    %265 = vmatpush1.msra.mxu0 0.0
    %266 = vmatprep.subr.mxu0 0.0
    %267 = vmatpush1.msra.mxu0 0.0
    %268 = vmatprep.subr.mxu0 0.0
    %269 = vmatpush1.msra.mxu0 0.0
    %270 = vmatprep.subr.mxu0 0.0
    %271 = vmatpush1.msra.mxu0 0.0
    %272 = vmatprep.subr.mxu0 0.0
    %273 = vmatpush1.msra.mxu0 0.0
    %274 = vmatprep.subr.mxu0 0.0
    %275 = vmatpush1.msra.mxu0 0.0
    %276 = vmatprep.subr.mxu0 0.0
    %277 = vmatpush1.msra.mxu0 0.0
    %278 = vmatprep.subr.mxu0 0.0
    %279 = vmatpush1.msra.mxu0 0.0
    %280 = vmatprep.subr.mxu0 0.0
    %281 = vmatpush1.msra.mxu0 0.0
    %282 = vmatprep.mubr.f32.mxu0 0.0
    %283 = vmatmul.mubr.f32.gmra.mrb[0].mxu0 %v201
    %v284 = vpop.f32.mrb[0].mxu0
    %v285 = vadd.f32 0.0, %v284
    %v286 = vpop.f32.mrb[0].mxu0
    %287 = vdwg.mxu0
    %v288 = vld [vmem:[%s6] sm:$0x1]
    %v290 = vlaneseq
    %v291 = vshrl.u32 %v290, 7
    %v292 = vsub.s32 0, %v291
    %v293 = vrot.slane %v288, %v292
    %295 = vmatprep.subr.mxu0 0.0
    %296 = vmatpush1.msra.mxu0 %v285
    %297 = vmatprep.subr.mxu0 0.0
    %298 = vmatpush1.msra.mxu0 0.0
    %299 = vmatprep.subr.mxu0 0.0
    %300 = vmatpush1.msra.mxu0 0.0
    %301 = vmatprep.subr.mxu0 0.0
    %302 = vmatpush1.msra.mxu0 0.0
    %303 = vmatprep.subr.mxu0 0.0
    %304 = vmatpush1.msra.mxu0 0.0
    %305 = vmatprep.subr.mxu0 0.0
    %306 = vmatpush1.msra.mxu0 0.0
    %307 = vmatprep.subr.mxu0 0.0
    %308 = vmatpush1.msra.mxu0 0.0
    %309 = vmatprep.subr.mxu0 0.0
    %310 = vmatpush1.msra.mxu0 0.0
    %311 = vmatprep.subr.mxu0 0.0
    %312 = vmatpush1.msra.mxu0 0.0
    %313 = vmatprep.subr.mxu0 0.0
    %314 = vmatpush1.msra.mxu0 0.0
    %315 = vmatprep.subr.mxu0 0.0
    %316 = vmatpush1.msra.mxu0 0.0
    %317 = vmatprep.subr.mxu0 0.0
    %318 = vmatpush1.msra.mxu0 0.0
    %319 = vmatprep.subr.mxu0 0.0
    %320 = vmatpush1.msra.mxu0 0.0
    %321 = vmatprep.subr.mxu0 0.0
    %322 = vmatpush1.msra.mxu0 0.0
    %323 = vmatprep.subr.mxu0 0.0
    %324 = vmatpush1.msra.mxu0 0.0
    %325 = vmatprep.subr.mxu0 0.0
    %326 = vmatpush1.msra.mxu0 0.0
    %327 = vmatprep.subr.mxu0 0.0
    %328 = vmatpush1.msra.mxu0 0.0
    %329 = vmatprep.subr.mxu0 0.0
    %330 = vmatpush1.msra.mxu0 0.0
    %331 = vmatprep.subr.mxu0 0.0
    %332 = vmatpush1.msra.mxu0 0.0
    %333 = vmatprep.subr.mxu0 0.0
    %334 = vmatpush1.msra.mxu0 0.0
    %335 = vmatprep.subr.mxu0 0.0
    %336 = vmatpush1.msra.mxu0 0.0
    %337 = vmatprep.subr.mxu0 0.0
    %338 = vmatpush1.msra.mxu0 0.0
    %339 = vmatprep.subr.mxu0 0.0
    %340 = vmatpush1.msra.mxu0 0.0
    %341 = vmatprep.subr.mxu0 0.0
    %342 = vmatpush1.msra.mxu0 0.0
    %343 = vmatprep.subr.mxu0 0.0
    %344 = vmatpush1.msra.mxu0 0.0
    %345 = vmatprep.subr.mxu0 0.0
    %346 = vmatpush1.msra.mxu0 0.0
    %347 = vmatprep.subr.mxu0 0.0
    %348 = vmatpush1.msra.mxu0 0.0
    %349 = vmatprep.subr.mxu0 0.0
    %350 = vmatpush1.msra.mxu0 0.0
    %351 = vmatprep.subr.mxu0 0.0
    %352 = vmatpush1.msra.mxu0 0.0
    %353 = vmatprep.subr.mxu0 0.0
    %354 = vmatpush1.msra.mxu0 0.0
    %355 = vmatprep.subr.mxu0 0.0
    %356 = vmatpush1.msra.mxu0 0.0
    %357 = vmatprep.subr.mxu0 0.0
    %358 = vmatpush1.msra.mxu0 0.0
    %359 = vmatprep.mubr.f32.mxu0 0.0
    %360 = vmatmul.mubr.f32.gmra.mrb[0].mxu0 %v127
    %v361 = vpop.f32.mrb[0].mxu0
    %v362 = vadd.f32 %v293, %v361
    %v363 = vpop.f32.mrb[0].mxu0
    %364 = vdwg.mxu0
    %vm365 = vcmp.gt.f32.partialorder %v362, 0.0
    %v366 = vmul.f32 %v362, 0.25
    %v367 = vsel %vm365, %v362, %v366
    %v368 = vld [vmem:[%s4] sm:$0xff]
    %v369 = vld [vmem:[%s4 + $0x8] sm:$0xff]
    %v370 = vld [vmem:[%s4 + $0x10] sm:$0xff]
    %v371 = vld [vmem:[%s4 + $0x18] sm:$0xff]
    %v372 = vld [vmem:[%s4 + $0x20] sm:$0xff]
    %v373 = vld [vmem:[%s4 + $0x28] sm:$0xff]
    %v374 = vld [vmem:[%s4 + $0x30] sm:$0xff]
    %v375 = vld [vmem:[%s4 + $0x38] sm:$0xff]
    %v376 = vld [vmem:[%s4 + $0x40] sm:$0xff]
    %v377 = vld [vmem:[%s4 + $0x48] sm:$0xff]
    %v378 = vld [vmem:[%s4 + $0x50] sm:$0xff]
    %v379 = vld [vmem:[%s4 + $0x58] sm:$0xff]
    %v380 = vld [vmem:[%s4 + $0x60] sm:$0xff]
    %v381 = vld [vmem:[%s4 + $0x68] sm:$0xff]
    %v382 = vld [vmem:[%s4 + $0x70] sm:$0xff]
    %v383 = vld [vmem:[%s4 + $0x78] sm:$0xff]
    %384 = vmatprep.subr.mxu0 0.0
    %385 = vmatpush1.msra.mxu0 %v368
    %386 = vmatprep.subr.mxu0 0.0
    %387 = vmatpush1.msra.mxu0 %v369
    %388 = vmatprep.subr.mxu0 0.0
    %389 = vmatpush1.msra.mxu0 %v370
    %390 = vmatprep.subr.mxu0 0.0
    %391 = vmatpush1.msra.mxu0 %v371
    %392 = vmatprep.subr.mxu0 0.0
    %393 = vmatpush1.msra.mxu0 %v372
    %394 = vmatprep.subr.mxu0 0.0
    %395 = vmatpush1.msra.mxu0 %v373
    %396 = vmatprep.subr.mxu0 0.0
    %397 = vmatpush1.msra.mxu0 %v374
    %398 = vmatprep.subr.mxu0 0.0
    %399 = vmatpush1.msra.mxu0 %v375
    %400 = vmatprep.subr.mxu0 0.0
    %401 = vmatpush1.msra.mxu0 %v376
    %402 = vmatprep.subr.mxu0 0.0
    %403 = vmatpush1.msra.mxu0 %v377
    %404 = vmatprep.subr.mxu0 0.0
    %405 = vmatpush1.msra.mxu0 %v378
    %406 = vmatprep.subr.mxu0 0.0
    %407 = vmatpush1.msra.mxu0 %v379
    %408 = vmatprep.subr.mxu0 0.0
    %409 = vmatpush1.msra.mxu0 %v380
    %410 = vmatprep.subr.mxu0 0.0
    %411 = vmatpush1.msra.mxu0 %v381
    %412 = vmatprep.subr.mxu0 0.0
    %413 = vmatpush1.msra.mxu0 %v382
    %414 = vmatprep.subr.mxu0 0.0
    %415 = vmatpush1.msra.mxu0 %v383
    %416 = vmatprep.subr.mxu0 0.0
    %417 = vmatpush1.msra.mxu0 0.0
    %418 = vmatprep.subr.mxu0 0.0
    %419 = vmatpush1.msra.mxu0 0.0
    %420 = vmatprep.subr.mxu0 0.0
    %421 = vmatpush1.msra.mxu0 0.0
    %422 = vmatprep.subr.mxu0 0.0
    %423 = vmatpush1.msra.mxu0 0.0
    %424 = vmatprep.subr.mxu0 0.0
    %425 = vmatpush1.msra.mxu0 0.0
    %426 = vmatprep.subr.mxu0 0.0
    %427 = vmatpush1.msra.mxu0 0.0
    %428 = vmatprep.subr.mxu0 0.0
    %429 = vmatpush1.msra.mxu0 0.0
    %430 = vmatprep.subr.mxu0 0.0
    %431 = vmatpush1.msra.mxu0 0.0
    %432 = vmatprep.subr.mxu0 0.0
    %433 = vmatpush1.msra.mxu0 0.0
    %434 = vmatprep.subr.mxu0 0.0
    %435 = vmatpush1.msra.mxu0 0.0
    %436 = vmatprep.subr.mxu0 0.0
    %437 = vmatpush1.msra.mxu0 0.0
    %438 = vmatprep.subr.mxu0 0.0
    %439 = vmatpush1.msra.mxu0 0.0
    %440 = vmatprep.subr.mxu0 0.0
    %441 = vmatpush1.msra.mxu0 0.0
    %442 = vmatprep.subr.mxu0 0.0
    %443 = vmatpush1.msra.mxu0 0.0
    %444 = vmatprep.subr.mxu0 0.0
    %445 = vmatpush1.msra.mxu0 0.0
    %446 = vmatprep.subr.mxu0 0.0
    %447 = vmatpush1.msra.mxu0 0.0
    %448 = vmatprep.mubr.f32.mxu0 0.0
    %449 = vmatmul.mubr.f32.gmra.mrb[0].mxu0 %v367
    %v450 = vpop.f32.mrb[0].mxu0
    %v451 = vadd.f32 0.0, %v450
    %v452 = vpop.f32.mrb[0].mxu0
    %453 = vdwg.mxu0
    %v454 = vld [vmem:[%s7] sm:$0x1]
    %v456 = vlaneseq
    %v457 = vshrl.u32 %v456, 7
    %v458 = vsub.s32 0, %v457
    %v459 = vrot.slane %v454, %v458
    %461 = vmatprep.subr.mxu0 0.0
    %462 = vmatpush1.msra.mxu0 %v451
    %463 = vmatprep.subr.mxu0 0.0
    %464 = vmatpush1.msra.mxu0 0.0
    %465 = vmatprep.subr.mxu0 0.0
    %466 = vmatpush1.msra.mxu0 0.0
    %467 = vmatprep.subr.mxu0 0.0
    %468 = vmatpush1.msra.mxu0 0.0
    %469 = vmatprep.subr.mxu0 0.0
    %470 = vmatpush1.msra.mxu0 0.0
    %471 = vmatprep.subr.mxu0 0.0
    %472 = vmatpush1.msra.mxu0 0.0
    %473 = vmatprep.subr.mxu0 0.0
    %474 = vmatpush1.msra.mxu0 0.0
    %475 = vmatprep.subr.mxu0 0.0
    %476 = vmatpush1.msra.mxu0 0.0
    %477 = vmatprep.subr.mxu0 0.0
    %478 = vmatpush1.msra.mxu0 0.0
    %479 = vmatprep.subr.mxu0 0.0
    %480 = vmatpush1.msra.mxu0 0.0
    %481 = vmatprep.subr.mxu0 0.0
    %482 = vmatpush1.msra.mxu0 0.0
    %483 = vmatprep.subr.mxu0 0.0
    %484 = vmatpush1.msra.mxu0 0.0
    %485 = vmatprep.subr.mxu0 0.0
    %486 = vmatpush1.msra.mxu0 0.0
    %487 = vmatprep.subr.mxu0 0.0
    %488 = vmatpush1.msra.mxu0 0.0
    %489 = vmatprep.subr.mxu0 0.0
    %490 = vmatpush1.msra.mxu0 0.0
    %491 = vmatprep.subr.mxu0 0.0
    %492 = vmatpush1.msra.mxu0 0.0
    %493 = vmatprep.subr.mxu0 0.0
    %494 = vmatpush1.msra.mxu0 0.0
    %495 = vmatprep.subr.mxu0 0.0
    %496 = vmatpush1.msra.mxu0 0.0
    %497 = vmatprep.subr.mxu0 0.0
    %498 = vmatpush1.msra.mxu0 0.0
    %499 = vmatprep.subr.mxu0 0.0
    %500 = vmatpush1.msra.mxu0 0.0
    %501 = vmatprep.subr.mxu0 0.0
    %502 = vmatpush1.msra.mxu0 0.0
    %503 = vmatprep.subr.mxu0 0.0
    %504 = vmatpush1.msra.mxu0 0.0
    %505 = vmatprep.subr.mxu0 0.0
    %506 = vmatpush1.msra.mxu0 0.0
    %507 = vmatprep.subr.mxu0 0.0
    %508 = vmatpush1.msra.mxu0 0.0
    %509 = vmatprep.subr.mxu0 0.0
    %510 = vmatpush1.msra.mxu0 0.0
    %511 = vmatprep.subr.mxu0 0.0
    %512 = vmatpush1.msra.mxu0 0.0
    %513 = vmatprep.subr.mxu0 0.0
    %514 = vmatpush1.msra.mxu0 0.0
    %515 = vmatprep.subr.mxu0 0.0
    %516 = vmatpush1.msra.mxu0 0.0
    %517 = vmatprep.subr.mxu0 0.0
    %518 = vmatpush1.msra.mxu0 0.0
    %519 = vmatprep.subr.mxu0 0.0
    %520 = vmatpush1.msra.mxu0 0.0
    %521 = vmatprep.subr.mxu0 0.0
    %522 = vmatpush1.msra.mxu0 0.0
    %523 = vmatprep.subr.mxu0 0.0
    %524 = vmatpush1.msra.mxu0 0.0
    %525 = vmatprep.mubr.f32.mxu0 0.0
    %526 = vmatmul.mubr.f32.gmra.mrb[0].mxu0 %v127
    %v527 = vpop.f32.mrb[0].mxu0
    %v528 = vadd.f32 %v459, %v527
    %v529 = vpop.f32.mrb[0].mxu0
    %530 = vdwg.mxu0
    %vm531 = vcmp.gt.f32.partialorder %v528, 0.0
    %v532 = vmul.f32 %v528, 0.25
    %v533 = vsel %vm531, %v528, %v532
    %534 = vst [vmem:[#allocation2] sm:$0xff] %v533
    // Predicated region
    $region34: #{gcn_e_forward.1} parent=1 // pred_check
      _
    $region35: #{gcn_e_forward.1} parent=1 // pred_check_branch
      %536 = sbr.rel (0) target = $region37
    $region36: #{gcn_e_forward.1} parent=1 // pred_region
      %s538 = ssub.s32 128, 128
      %539 = vsyncadd [#allocation3], %s538
      %s541 = sshll.u32 [#allocation2], 4
      %s542 = int_to_ptr.vmem [resolvable:$true] %s541
      %544 = dma.vmem_to_hbm [thread:$0]  %s542, 128, %s8, [#allocation3]
    $region37: #{gcn_e_forward.1} parent=1 // pred_fallthru
      _
    // Predicated region
    $region38: #{gcn_e_forward.1} parent=1 // pred_check
      _
    $region39: #{gcn_e_forward.1} parent=1 // pred_check_branch
      %546 = sbr.rel (0) target = $region41
    $region40: #{gcn_e_forward.1} parent=1 // pred_region
      %547 = dma.done [#allocation3], 128
    $region41: #{gcn_e_forward.1} parent=1 // pred_fallthru
      _
    %548 = vsyncpa [#allocation3], 1

</llo_original>
